<compile_context>
chip_gen: v6e
topology: v6e:2x2x1
jax: 0.10.0
libtpu: 0.0.40
codegen_flags: <defaults>
</compile_context>

<pallas_src>
import jax
import jax.numpy as jnp
import numpy as np
from jax.experimental import pallas as pl
from jax.experimental.pallas import tpu as pltpu


def _round_up(x, m):
    return ((x + m - 1) // m) * m


def _nearest_idx(out_size, in_size):
    # torch F.interpolate(mode='nearest'): src = floor(dst * in/out)
    return (jnp.arange(out_size) * in_size) // out_size


def _make_proto_loss_kernel(c_true, sumafter):
    inv_c = float(1.0 / c_true)

    def kernel(cls_ref, feat_ref, proto_ref, out_ref,
               featsum_acc, sqfeat_acc, count_acc):
        n = pl.program_id(0)

        @pl.when(n == 0)
        def _():
            featsum_acc[...] = jnp.zeros_like(featsum_acc)
            sqfeat_acc[...] = jnp.zeros_like(sqfeat_acc)
            count_acc[...] = jnp.zeros_like(count_acc)

        feat = feat_ref[...]                      # (Tn, Cp) f32
        cls = cls_ref[...]                        # (1, Tn) int32
        kp = featsum_acc.shape[0]
        tn = feat.shape[0]

        class_ids = jax.lax.broadcasted_iota(jnp.int32, (kp, tn), 0)
        onehot_t = (class_ids == cls).astype(jnp.float32)      # (Kp, Tn)

        # Per-class scatter-sums via one-hot matmuls (MXU); counts via XLU.
        featsum_acc[...] += jnp.dot(onehot_t, feat,
                                    preferred_element_type=jnp.float32)
        sqfeat_acc[...] += jnp.dot(onehot_t, feat * feat,
                                   preferred_element_type=jnp.float32)
        count_acc[...] += jnp.sum(onehot_t, axis=1, keepdims=True)

        @pl.when(n == pl.num_programs(0) - 1)
        def _():
            featsum = featsum_acc[...]                              # (Kp, Cp)
            count = count_acc[...]                                  # (Kp, 1)
            sqsum = jnp.sum(sqfeat_acc[...], axis=1, keepdims=True) # (Kp, 1)
            proto = proto_ref[...].astype(jnp.float32)              # (Kp, Cp)

            k_idx = jax.lax.broadcasted_iota(jnp.int32, (kp, 1), 0)
            present = jnp.logical_and(count > 0.0, k_idx >= 1)      # (Kp, 1)
            safe_count = jnp.where(present, count, 1.0)

            if sumafter:
                mean = featsum / safe_count
                diff = mean - proto
                mse = jnp.sum(diff * diff, axis=1, keepdims=True) * inv_c
                n_present = jnp.sum(jnp.where(present, 1.0, 0.0))
                denom = jnp.maximum(n_present, 1.0)
                loss = jnp.sum(jnp.where(present, mse, 0.0)) / denom
            else:
                dot_fp = jnp.sum(featsum * proto, axis=1, keepdims=True)
                pnorm2 = jnp.sum(proto * proto, axis=1, keepdims=True)
                per_class = ((sqsum - 2.0 * dot_fp + count * pnorm2)
                             / safe_count) * inv_c
                loss = jnp.sum(jnp.where(present, per_class, 0.0))

            out_ref[0, 0] = loss

    return kernel


def distillation_encoder_prototypes_loss(
        outputs_old, features, labels, classes_old, incremental_step,
        prototypes, *, num_classes, sequential=False,
        loss_de_prototypes_sumafter=False, val=False, bkgpaint_flag=False,
        outputs=None, features_old=None, count_features=None, overlapped=False):
    """Forward of DistillationEncoderPrototypesLoss (returns a scalar)."""
    del outputs, features_old, count_features, overlapped  # unused by forward()

    if num_classes is None or val or incremental_step == 0:
        return jnp.float32(0.0)

    B, C, Hf, Wf = features.shape
    K = prototypes.shape[0]

    # ---- label / pseudo-label plumbing (integer gathers; kept in JAX) -------
    H, W = labels.shape[-2:]
    ri = _nearest_idx(Hf, H)
    ci = _nearest_idx(Wf, W)
    labels_down = labels[:, ri[:, None], ci[None, :]].astype(jnp.int32)  # (B,Hf,Wf)

    if bkgpaint_flag:
        bgr_mask = jnp.logical_and(labels_down < classes_old, labels_down > 0)
    else:
        bgr_mask = labels_down == 0

    if sequential:
        pseudo = labels_down * (labels_down < classes_old).astype(jnp.int32)
    else:
        Ho, Wo = outputs_old.shape[-2:]
        ro = _nearest_idx(Hf, Ho)
        co = _nearest_idx(Wf, Wo)
        oo_down = outputs_old[:, :, ro[:, None], co[None, :]]   # (B, Kold, Hf, Wf)
        oo_arg = jnp.argmax(oo_down, axis=1).astype(jnp.int32)  # (B, Hf, Wf)
        pseudo = oo_arg * bgr_mask.astype(jnp.int32)

    # ---- lane-dense, padded layouts for the kernel ---------------------------
    N = B * Hf * Wf
    feats = jnp.transpose(features.astype(jnp.float32), (0, 2, 3, 1)).reshape(N, C)
    cls = pseudo.reshape(1, N)

    Cp = _round_up(max(C, 1), 128)
    Kp = _round_up(max(K, 2), 8)

    tile_n = 2048
    # keep each (tile_n, Cp) f32 block <= 4 MiB so double buffering stays small
    # even on v7x's 64 MiB VMEM
    while tile_n > 512 and tile_n * Cp * 4 > 4 * 1024 * 1024:
        tile_n //= 2
    tile_n = min(tile_n, _round_up(N, 512))
    Np = _round_up(N, tile_n)
    num_tiles = Np // tile_n

    # Zero padding is neutral: padded channels contribute 0 to every sum, and
    # padded pixels get class 0, which is excluded from the loss.
    feats_p = jnp.pad(feats, ((0, Np - N), (0, Cp - C)))
    cls_p = jnp.pad(cls, ((0, 0), (0, Np - N)))
    proto_p = jnp.pad(prototypes.astype(jnp.float32), ((0, Kp - K), (0, Cp - C)))

    kernel = _make_proto_loss_kernel(C, bool(loss_de_prototypes_sumafter))

    out = pl.pallas_call(
        kernel,
        out_shape=jax.ShapeDtypeStruct((1, 1), jnp.float32),
        grid_spec=pltpu.PrefetchScalarGridSpec(
            num_scalar_prefetch=0,
            grid=(num_tiles,),
            in_specs=[
                pl.BlockSpec((1, tile_n), lambda n: (0, n)),     # pixel classes
                pl.BlockSpec((tile_n, Cp), lambda n: (n, 0)),    # pixel features
                pl.BlockSpec((Kp, Cp), lambda n: (0, 0)),        # prototypes
            ],
            out_specs=pl.BlockSpec(memory_space=pltpu.SMEM),
            scratch_shapes=[
                pltpu.VMEM((Kp, Cp), jnp.float32),  # per-class feature sums
                pltpu.VMEM((Kp, Cp), jnp.float32),  # per-class squared-feature sums
                pltpu.VMEM((Kp, 1), jnp.float32),   # per-class pixel counts
            ],
        ),
        compiler_params=pltpu.CompilerParams(
            dimension_semantics=("arbitrary",),
            vmem_limit_bytes=48 * 1024 * 1024,
        ),
    )(cls_p, feats_p, proto_p)
    return out[0, 0]


def _reference_loss_numpy(outputs_old, features, labels, classes_old,
                          incremental_step, prototypes, num_classes,
                          sequential, sumafter, val, bkgpaint_flag):
    """Mirror of the torch forward (per-pixel feature-vector interpretation)."""
    outputs_old = np.asarray(outputs_old)
    features = np.asarray(features)
    labels = np.asarray(labels)
    prototypes = np.asarray(prototypes)

    total = 0.0
    if num_classes is None or val or incremental_step == 0:
        return total

    B, C, Hf, Wf = features.shape
    H, W = labels.shape[-2:]
    ri = (np.arange(Hf) * H) // Hf
    ci = (np.arange(Wf) * W) // Wf
    labels_down = labels[:, ri[:, None], ci[None, :]].astype(np.int64)

    if bkgpaint_flag:
        bgr = ((labels_down < classes_old) & (labels_down > 0)).astype(np.int64)
    else:
        bgr = (labels_down == 0).astype(np.int64)

    if sequential:
        pseudo = labels_down * (labels_down < classes_old).astype(np.int64)
    else:
        Ho, Wo = outputs_old.shape[-2:]
        ro = (np.arange(Hf) * Ho) // Hf
        co = (np.arange(Wf) * Wo) // Wf
        arg = np.argmax(outputs_old, axis=1)
        arg_down = arg[:, ro[:, None], co[None, :]].astype(np.int64)
        pseudo = arg_down * bgr

    cl_present = np.unique(pseudo)
    if cl_present.size and cl_present[0] == 0:
        cl_present = cl_present[1:]

    feats_pix = np.transpose(features, (0, 2, 3, 1)).astype(np.float64)  # (B,Hf,Wf,C)
    for cl in cl_present:
        proto = prototypes[cl].astype(np.float64)
        cur = feats_pix[pseudo == cl]                 # (Npix, C)
        if sumafter:
            cp = cur.mean(axis=0)
            total += np.mean((cp - proto) ** 2) / cl_present.shape[0]
        else:
            for f in range(cur.shape[0]):
                total += np.mean((cur[f] - proto) ** 2) / cur.shape[0]
    return float(total)


if __name__ == "__main__":
    key = jax.random.PRNGKey(0)
    k1, k2, k3, k4 = jax.random.split(key, 4)

    # Small shapes consistent with the module: features at 16x16 with 32
    # channels, labels/logits at 64x64, 8 total classes of which 5 are "old".
    B, C, Hf, Wf = 2, 32, 16, 16
    H, W = 64, 64
    num_classes, classes_old = 8, 5

    features = jax.random.normal(k1, (B, C, Hf, Wf), dtype=jnp.float32)
    outputs_old = jax.random.normal(k2, (B, classes_old, H, W), dtype=jnp.float32)
    labels = jax.random.randint(k3, (B, H, W), 0, num_classes, dtype=jnp.int32)
    prototypes = jax.random.normal(k4, (num_classes, C), dtype=jnp.float32)

    configs = [
        dict(sequential=False, loss_de_prototypes_sumafter=False),
        dict(sequential=False, loss_de_prototypes_sumafter=True),
        dict(sequential=True, loss_de_prototypes_sumafter=False),
    ]
    for cfg in configs:
        loss = distillation_encoder_prototypes_loss(
            outputs_old, features, labels,
            classes_old=classes_old, incremental_step=1,
            prototypes=prototypes, num_classes=num_classes,
            val=False, bkgpaint_flag=False, **cfg)
        loss = jax.block_until_ready(loss)

        ref = _reference_loss_numpy(
            outputs_old, features, labels, classes_old, 1, prototypes,
            num_classes, cfg["sequential"], cfg["loss_de_prototypes_sumafter"],
            False, False)
        assert jnp.allclose(loss, ref, rtol=1e-4, atol=1e-4), (cfg, float(loss), ref)

    print("KERNEL_OK")
</pallas_src>

<mosaic_0001>
module attributes {stable_mosaic.version = 11 : i64} {
  func.func @kernel(%arg0: i32, %arg1: memref<1x512xi32, #tpu.memory_space<vmem>>, %arg2: memref<512x128xf32, #tpu.memory_space<vmem>>, %arg3: memref<8x128xf32, #tpu.memory_space<vmem>>, %arg4: memref<1x1xf32, #tpu.memory_space<smem>>, %arg5: memref<8x128xf32, #tpu.memory_space<vmem>>, %arg6: memref<8x128xf32, #tpu.memory_space<vmem>>, %arg7: memref<8x1xf32, #tpu.memory_space<vmem>>) attributes {dimension_semantics = [#tpu.dimension_semantics<arbitrary>], iteration_bounds = array<i64: 1>, scalar_prefetch = 0 : i64, scratch_operands = 3 : i64, tpu.core_type = #tpu.core_type<tc>, window_params = [{transform_indices = @transform_0, window_bounds = array<i64: 1, 512>}, {transform_indices = @transform_1, window_bounds = array<i64: 512, 128>}, {pipeline_mode = #tpu.pipeline_mode<synchronous>, transform_indices = @transform_2, window_bounds = array<i64: 8, 128>}, {transform_indices = @transform_3, window_bounds = array<i64: 1, 1>}]} {
    %c0_i32 = arith.constant 0 : i32
    %0 = arith.cmpi eq, %arg0, %c0_i32 : i32
    %1 = arith.extui %0 : i1 to i32
    %c0_i32_0 = arith.constant 0 : i32
    %2 = arith.cmpi ne, %1, %c0_i32_0 : i32
    scf.if %2 {
      %cst_20 = arith.constant 0.000000e+00 : f32
      %27 = vector.broadcast %cst_20 : f32 to vector<8x128xf32>
      %c0_21 = arith.constant 0 : index
      %c0_22 = arith.constant 0 : index
      %28 = vector.load %arg5[%c0_21, %c0_22] : memref<8x128xf32, #tpu.memory_space<vmem>>, vector<8x128xf32>
      tpu.vector_store %arg5[%c0_21, %c0_22], %27 {strides = array<i32>} : memref<8x128xf32, #tpu.memory_space<vmem>>, vector<8x128xf32>,
      %cst_23 = arith.constant 0.000000e+00 : f32
      %29 = vector.broadcast %cst_23 : f32 to vector<8x128xf32>
      %c0_24 = arith.constant 0 : index
      %c0_25 = arith.constant 0 : index
      %30 = vector.load %arg6[%c0_24, %c0_25] : memref<8x128xf32, #tpu.memory_space<vmem>>, vector<8x128xf32>
      tpu.vector_store %arg6[%c0_24, %c0_25], %29 {strides = array<i32>} : memref<8x128xf32, #tpu.memory_space<vmem>>, vector<8x128xf32>,
      %cst_26 = arith.constant 0.000000e+00 : f32
      %31 = vector.broadcast %cst_26 : f32 to vector<8x1xf32>
      %c0_27 = arith.constant 0 : index
      %c0_28 = arith.constant 0 : index
      %32 = vector.load %arg7[%c0_27, %c0_28] : memref<8x1xf32, #tpu.memory_space<vmem>>, vector<8x1xf32>
      tpu.vector_store %arg7[%c0_27, %c0_28], %31 {strides = array<i32>} : memref<8x1xf32, #tpu.memory_space<vmem>>, vector<8x1xf32>,
    } else {
    }
    %c0 = arith.constant 0 : index
    %c0_1 = arith.constant 0 : index
    %3 = vector.load %arg2[%c0, %c0_1] : memref<512x128xf32, #tpu.memory_space<vmem>>, vector<512x128xf32>
    %c0_2 = arith.constant 0 : index
    %c0_3 = arith.constant 0 : index
    %4 = vector.load %arg1[%c0_2, %c0_3] : memref<1x512xi32, #tpu.memory_space<vmem>>, vector<1x512xi32>
    %5 = tpu.iota {dimensions = array<i32: 0>} : vector<8x512xi32>
    %6 = vector.broadcast %4 : vector<1x512xi32> to vector<8x512xi32>
    %7 = arith.cmpi eq, %5, %6 : vector<8x512xi32>
    %8 = arith.extui %7 : vector<8x512xi1> to vector<8x512xi32>
    %9 = arith.sitofp %8 : vector<8x512xi32> to vector<8x512xf32>
    %c0_4 = arith.constant 0 : index
    %c0_5 = arith.constant 0 : index
    %10 = vector.load %arg5[%c0_4, %c0_5] : memref<8x128xf32, #tpu.memory_space<vmem>>, vector<8x128xf32>
    %cst = arith.constant dense<0.000000e+00> : vector<8x128xf32>
    %11 = tpu.matmul %9, %3, %cst {dimension_numbers = #tpu.dot_dimension_numbers<[1], [0], [0], [1], [0, 0, 1, 1], [], []>} : vector<8x512xf32>, vector<512x128xf32>, vector<8x128xf32> -> vector<8x128xf32>
    %12 = arith.addf %10, %11 : vector<8x128xf32>
    %c0_6 = arith.constant 0 : index
    %c0_7 = arith.constant 0 : index
    %13 = vector.load %arg5[%c0_6, %c0_7] : memref<8x128xf32, #tpu.memory_space<vmem>>, vector<8x128xf32>
    tpu.vector_store %arg5[%c0_6, %c0_7], %12 {strides = array<i32>} : memref<8x128xf32, #tpu.memory_space<vmem>>, vector<8x128xf32>,
    %c0_8 = arith.constant 0 : index
    %c0_9 = arith.constant 0 : index
    %14 = vector.load %arg6[%c0_8, %c0_9] : memref<8x128xf32, #tpu.memory_space<vmem>>, vector<8x128xf32>
    %15 = arith.mulf %3, %3 : vector<512x128xf32>
    %cst_10 = arith.constant dense<0.000000e+00> : vector<8x128xf32>
    %16 = tpu.matmul %9, %15, %cst_10 {dimension_numbers = #tpu.dot_dimension_numbers<[1], [0], [0], [1], [0, 0, 1, 1], [], []>} : vector<8x512xf32>, vector<512x128xf32>, vector<8x128xf32> -> vector<8x128xf32>
    %17 = arith.addf %14, %16 : vector<8x128xf32>
    %c0_11 = arith.constant 0 : index
    %c0_12 = arith.constant 0 : index
    %18 = vector.load %arg6[%c0_11, %c0_12] : memref<8x128xf32, #tpu.memory_space<vmem>>, vector<8x128xf32>
    tpu.vector_store %arg6[%c0_11, %c0_12], %17 {strides = array<i32>} : memref<8x128xf32, #tpu.memory_space<vmem>>, vector<8x128xf32>,
    %c0_13 = arith.constant 0 : index
    %c0_14 = arith.constant 0 : index
    %19 = vector.load %arg7[%c0_13, %c0_14] : memref<8x1xf32, #tpu.memory_space<vmem>>, vector<8x1xf32>
    %cst_15 = arith.constant dense<0.000000e+00> : vector<8xf32>
    %20 = vector.multi_reduction <add>, %9, %cst_15 [1] : vector<8x512xf32> to vector<8xf32>
    %21 = vector.shape_cast %20 : vector<8xf32> to vector<8x1xf32>
    %22 = arith.addf %19, %21 : vector<8x1xf32>
    %c0_16 = arith.constant 0 : index
    %c0_17 = arith.constant 0 : index
    %23 = vector.load %arg7[%c0_16, %c0_17] : memref<8x1xf32, #tpu.memory_space<vmem>>, vector<8x1xf32>
    tpu.vector_store %arg7[%c0_16, %c0_17], %22 {strides = array<i32>} : memref<8x1xf32, #tpu.memory_space<vmem>>, vector<8x1xf32>,
    %c0_i32_18 = arith.constant 0 : i32
    %24 = arith.cmpi eq, %arg0, %c0_i32_18 : i32
    %25 = arith.extui %24 : i1 to i32
    %c0_i32_19 = arith.constant 0 : i32
    %26 = arith.cmpi ne, %25, %c0_i32_19 : i32
    scf.if %26 {
      %c0_20 = arith.constant 0 : index
      %c0_21 = arith.constant 0 : index
      %27 = vector.load %arg5[%c0_20, %c0_21] : memref<8x128xf32, #tpu.memory_space<vmem>>, vector<8x128xf32>
      %c0_22 = arith.constant 0 : index
      %c0_23 = arith.constant 0 : index
      %28 = vector.load %arg7[%c0_22, %c0_23] : memref<8x1xf32, #tpu.memory_space<vmem>>, vector<8x1xf32>
      %c0_24 = arith.constant 0 : index
      %c0_25 = arith.constant 0 : index
      %29 = vector.load %arg6[%c0_24, %c0_25] : memref<8x128xf32, #tpu.memory_space<vmem>>, vector<8x128xf32>
      %cst_26 = arith.constant dense<0.000000e+00> : vector<8xf32>
      %30 = vector.multi_reduction <add>, %29, %cst_26 [1] : vector<8x128xf32> to vector<8xf32>
      %31 = vector.shape_cast %30 : vector<8xf32> to vector<8x1xf32>
      %c0_27 = arith.constant 0 : index
      %c0_28 = arith.constant 0 : index
      %32 = vector.load %arg3[%c0_27, %c0_28] : memref<8x128xf32, #tpu.memory_space<vmem>>, vector<8x128xf32>
      %33 = tpu.iota {dimensions = array<i32: 0>} : vector<8x1xi32>
      %cst_29 = arith.constant 0.000000e+00 : f32
      %34 = vector.broadcast %cst_29 : f32 to vector<8x1xf32>
      %35 = arith.cmpf ogt, %28, %34 : vector<8x1xf32>
      %c1_i32 = arith.constant 1 : i32
      %36 = vector.broadcast %c1_i32 : i32 to vector<8x1xi32>
      %37 = arith.cmpi sge, %33, %36 : vector<8x1xi32>
      %38 = arith.andi %35, %37 : vector<8x1xi1>
      %cst_30 = arith.constant 1.000000e+00 : f32
      %39 = vector.broadcast %cst_30 : f32 to vector<8x1xf32>
      %40 = arith.select %38, %28, %39 : vector<8x1xi1>, vector<8x1xf32>
      %41 = arith.mulf %27, %32 : vector<8x128xf32>
      %cst_31 = arith.constant dense<0.000000e+00> : vector<8xf32>
      %42 = vector.multi_reduction <add>, %41, %cst_31 [1] : vector<8x128xf32> to vector<8xf32>
      %43 = vector.shape_cast %42 : vector<8xf32> to vector<8x1xf32>
      %44 = arith.mulf %32, %32 : vector<8x128xf32>
      %cst_32 = arith.constant dense<0.000000e+00> : vector<8xf32>
      %45 = vector.multi_reduction <add>, %44, %cst_32 [1] : vector<8x128xf32> to vector<8xf32>
      %46 = vector.shape_cast %45 : vector<8xf32> to vector<8x1xf32>
      %cst_33 = arith.constant 2.000000e+00 : f32
      %47 = vector.broadcast %cst_33 : f32 to vector<8x1xf32>
      %48 = arith.mulf %47, %43 : vector<8x1xf32>
      %49 = arith.subf %31, %48 : vector<8x1xf32>
      %50 = arith.mulf %28, %46 : vector<8x1xf32>
      %51 = arith.addf %49, %50 : vector<8x1xf32>
      %52 = arith.divf %51, %40 : vector<8x1xf32>
      %cst_34 = arith.constant 3.125000e-02 : f32
      %53 = vector.broadcast %cst_34 : f32 to vector<8x1xf32>
      %54 = arith.mulf %52, %53 : vector<8x1xf32>
      %cst_35 = arith.constant 0.000000e+00 : f32
      %55 = vector.broadcast %cst_35 : f32 to vector<8x1xf32>
      %56 = arith.select %38, %54, %55 : vector<8x1xi1>, vector<8x1xf32>
      %57 = vector.shape_cast %56 : vector<8x1xf32> to vector<1x8x1xf32>
      %cst_36 = arith.constant dense<0.000000e+00> : vector<1xf32>
      %58 = vector.multi_reduction <add>, %57, %cst_36 [1, 2] : vector<1x8x1xf32> to vector<1xf32>
      %59 = vector.shape_cast %58 : vector<1xf32> to vector<1x1x1xf32>
      %60 = vector.extract %59[0, 0, 0] : f32 from vector<1x1x1xf32>
      %c0_37 = arith.constant 0 : index
      %c0_38 = arith.constant 0 : index
      %61 = memref.load %arg4[%c0_37, %c0_38] : memref<1x1xf32, #tpu.memory_space<smem>>
      memref.store %60, %arg4[%c0_37, %c0_38] : memref<1x1xf32, #tpu.memory_space<smem>>
    } else {
    }
    return
  }
  func.func @transform_0(%arg0: i32) -> (i32, i32) {
    %c0_i32 = arith.constant 0 : i32
    %c0_i32_0 = arith.constant 0 : i32
    return %c0_i32, %arg0 : i32, i32
  }
  func.func @transform_1(%arg0: i32) -> (i32, i32) {
    %c0_i32 = arith.constant 0 : i32
    %c0_i32_0 = arith.constant 0 : i32
    return %arg0, %c0_i32 : i32, i32
  }
  func.func @transform_2(%arg0: i32) -> (i32, i32) {
    %c0_i32 = arith.constant 0 : i32
    %c0_i32_0 = arith.constant 0 : i32
    %c0_i32_1 = arith.constant 0 : i32
    return %c0_i32, %c0_i32_0 : i32, i32
  }
  func.func @transform_3(%arg0: i32) -> (i32, i32) {
    %c0_i32 = arith.constant 0 : i32
    %c0_i32_0 = arith.constant 0 : i32
    %c0_i32_1 = arith.constant 0 : i32
    return %c0_i32, %c0_i32_0 : i32, i32
  }
}

</mosaic_0001>

<llo_original>
// kernel: tpu_custom_call.1
$region0: #{tpu_custom_call.1}
  #allocation0 [shape = 'u32[]', space=smem, size = 0x4, offset = 0x4, fixed_abs, tag = 'smem constant byte address 0x4 - core index']
  #allocation1 [shape = 'u32[144,128]{1,0:T(1,128)}', space=vmem, size = 0x12000, scoped, tag = 'internal scratch']
  #allocation2 [shape = 'f32[8,128]{1,0:T(8,128)}', space=vmem, size = 0x1000, scoped, tag = 'scratch operand']
  #allocation3 [shape = 'f32[8,128]{1,0:T(8,128)}', space=vmem, size = 0x1000, scoped, tag = 'scratch operand']
  #allocation4 [shape = 'f32[8,1]{1,0:T(8,128)}', space=vmem, size = 0x1000, scoped, tag = 'scratch operand']
  %s0 = inlined_call_operand.hbm [shape: s32[1,512], index: 0, kind: input, shape index: {}]
  %s1 = inlined_call_operand.hbm [shape: f32[512,128], index: 1, kind: input, shape index: {}]
  %s2 = inlined_call_operand.hbm [shape: f32[8,128], index: 2, kind: input, shape index: {}]
  %s3 = inlined_call_operand.hbm [shape: f32[1,1], index: 3, kind: output, shape index: {}]
  %s4 = sld [smem:[#allocation0]]
  $region42: #{tpu_custom_call.1} parent=0
    _
  %s6 = ssub.s32 1, %s4
  %s7 = scalar_select 0, %s6, %s4
  $region1: #{tpu_custom_call.1} parent=0
    #allocation5 [shape = 'u8[2048]{0}', space=vmem, size = 0x800, scoped, tag = 'input window, operand 0, single buffered']
    #allocation6 [shape = 's32[1]{0}', space=sflag, size = 0x4, scoped, tag = 'scoped memory for tpu_custom_call.1']
    #allocation7 [shape = 's32[1]{0}', space=sflag, size = 0x4, scoped, tag = 'scoped memory for tpu_custom_call.1']
    #allocation8 [shape = 'u8[262144]{0}', space=vmem, size = 0x40000, scoped, tag = 'input window, operand 1, single buffered']
    #allocation9 [shape = 's32[1]{0}', space=sflag, size = 0x4, scoped, tag = 'scoped memory for tpu_custom_call.1']
    #allocation10 [shape = 'u8[4096]{0}', space=vmem, size = 0x1000, scoped, tag = 'input window, operand 2, single buffered']
    #allocation11 [shape = 'u8[512]{0}', space=smem, size = 0x200, scoped, tag = 'output window, operand 0, single buffered']
    %8 = vsyncpa [#allocation6], 0
    %9 = vsyncpa [#allocation9], 0
    %10 = vsyncpa [#allocation7], 0
    // Predicated region
    $region2: #{tpu_custom_call.1} parent=1 // pred_check
      _
    $region3: #{tpu_custom_call.1} parent=1 // pred_check_branch
      %12 = sbr.rel (0) target = $region5
    $region4: #{tpu_custom_call.1} parent=1 // pred_region
      %s14 = ssub.s32 64, 64
      %15 = vsyncadd [#allocation6], %s14
      %s17 = sshll.u32 [#allocation5], 4
      %s18 = int_to_ptr.vmem [resolvable:$true] %s17
      %20 = dma.hbm_to_vmem [thread:$0]  %s0, 64, %s18, [#allocation6]
    $region5: #{tpu_custom_call.1} parent=1 // pred_fallthru
      _
    // Predicated region
    $region6: #{tpu_custom_call.1} parent=1 // pred_check
      _
    $region7: #{tpu_custom_call.1} parent=1 // pred_check_branch
      %22 = sbr.rel (0) target = $region9
    $region8: #{tpu_custom_call.1} parent=1 // pred_region
      %s24 = ssub.s32 8192, 8192
      %25 = vsyncadd [#allocation9], %s24
      %s26 = sshll.u32 [#allocation8], 4
      %s27 = int_to_ptr.vmem [resolvable:$true] %s26
      %32 = dma.hbm_to_vmem [thread:$0]  %s1, 8192, %s27, [#allocation9], 128, 128, 8
    $region9: #{tpu_custom_call.1} parent=1 // pred_fallthru
      _
    // Predicated region
    $region10: #{tpu_custom_call.1} parent=1 // pred_check
      _
    $region11: #{tpu_custom_call.1} parent=1 // pred_check_branch
      %34 = sbr.rel (0) target = $region13
    $region12: #{tpu_custom_call.1} parent=1 // pred_region
      %s36 = ssub.s32 128, 128
      %37 = vsyncadd [#allocation9], %s36
      %s39 = sshll.u32 [#allocation10], 4
      %s40 = int_to_ptr.vmem [resolvable:$true] %s39
      %42 = dma.hbm_to_vmem [thread:$0]  %s2, 128, %s40, [#allocation9]
    $region13: #{tpu_custom_call.1} parent=1 // pred_fallthru
      _
    // Predicated region
    $region14: #{tpu_custom_call.1} parent=1 // pred_check
      _
    $region15: #{tpu_custom_call.1} parent=1 // pred_check_branch
      %44 = sbr.rel (0) target = $region17
    $region16: #{tpu_custom_call.1} parent=1 // pred_region
      %45 = dma.done [#allocation6], 64
    $region17: #{tpu_custom_call.1} parent=1 // pred_fallthru
      _
    // Predicated region
    $region18: #{tpu_custom_call.1} parent=1 // pred_check
      _
    $region19: #{tpu_custom_call.1} parent=1 // pred_check_branch
      %47 = sbr.rel (0) target = $region21
    $region20: #{tpu_custom_call.1} parent=1 // pred_region
      %48 = dma.done [#allocation9], 8192
    $region21: #{tpu_custom_call.1} parent=1 // pred_fallthru
      _
    // Predicated region
    $region22: #{tpu_custom_call.1} parent=1 // pred_check
      _
    $region23: #{tpu_custom_call.1} parent=1 // pred_check_branch
      %50 = sbr.rel (0) target = $region25
    $region24: #{tpu_custom_call.1} parent=1 // pred_region
      %51 = dma.done [#allocation9], 128
    $region25: #{tpu_custom_call.1} parent=1 // pred_fallthru
      _
    %p52 = scmp.eq.s32.totalorder 0, 0
    // Predicated region
    $region26: #{tpu_custom_call.1} parent=1 // pred_check
      %p53 = pneg %p52
    $region27: #{tpu_custom_call.1} parent=1 // pred_check_branch
      %55 = sbr.rel (%p53) target = $region29
    $region28: #{tpu_custom_call.1} parent=1 // pred_region
      %56 = vst [vmem:[#allocation2] sm:$0xff] 0.0
      %57 = vst [vmem:[#allocation3] sm:$0xff] 0.0
      %vm58 = vcmask 7168
      %59 = vst.msk [vmem:[#allocation4] sm:$0xff] %vm58, 0.0
    $region29: #{tpu_custom_call.1} parent=1 // pred_fallthru
      _
    %v60 = vld [vmem:[#allocation8] sm:$0xff]
    %v61 = vld [vmem:[#allocation8 + $0x8] sm:$0xff]
    %v62 = vld [vmem:[#allocation8 + $0x10] sm:$0xff]
    %v63 = vld [vmem:[#allocation8 + $0x18] sm:$0xff]
    %v64 = vld [vmem:[#allocation8 + $0x20] sm:$0xff]
    %v65 = vld [vmem:[#allocation8 + $0x28] sm:$0xff]
    %v66 = vld [vmem:[#allocation8 + $0x30] sm:$0xff]
    %v67 = vld [vmem:[#allocation8 + $0x38] sm:$0xff]
    %v68 = vld [vmem:[#allocation8 + $0x40] sm:$0xff]
    %v69 = vld [vmem:[#allocation8 + $0x48] sm:$0xff]
    %v70 = vld [vmem:[#allocation8 + $0x50] sm:$0xff]
    %v71 = vld [vmem:[#allocation8 + $0x58] sm:$0xff]
    %v72 = vld [vmem:[#allocation8 + $0x60] sm:$0xff]
    %v73 = vld [vmem:[#allocation8 + $0x68] sm:$0xff]
    %v74 = vld [vmem:[#allocation8 + $0x70] sm:$0xff]
    %v75 = vld [vmem:[#allocation8 + $0x78] sm:$0xff]
    %v76 = vld [vmem:[#allocation8 + $0x80] sm:$0xff]
    %v77 = vld [vmem:[#allocation8 + $0x88] sm:$0xff]
    %v78 = vld [vmem:[#allocation8 + $0x90] sm:$0xff]
    %v79 = vld [vmem:[#allocation8 + $0x98] sm:$0xff]
    %v80 = vld [vmem:[#allocation8 + $0xa0] sm:$0xff]
    %v81 = vld [vmem:[#allocation8 + $0xa8] sm:$0xff]
    %v82 = vld [vmem:[#allocation8 + $0xb0] sm:$0xff]
    %v83 = vld [vmem:[#allocation8 + $0xb8] sm:$0xff]
    %v84 = vld [vmem:[#allocation8 + $0xc0] sm:$0xff]
    %v85 = vld [vmem:[#allocation8 + $0xc8] sm:$0xff]
    %v86 = vld [vmem:[#allocation8 + $0xd0] sm:$0xff]
    %v87 = vld [vmem:[#allocation8 + $0xd8] sm:$0xff]
    %v88 = vld [vmem:[#allocation8 + $0xe0] sm:$0xff]
    %v89 = vld [vmem:[#allocation8 + $0xe8] sm:$0xff]
    %v90 = vld [vmem:[#allocation8 + $0xf0] sm:$0xff]
    %v91 = vld [vmem:[#allocation8 + $0xf8] sm:$0xff]
    %v92 = vld [vmem:[#allocation8 + $0x100] sm:$0xff]
    %v93 = vld [vmem:[#allocation8 + $0x108] sm:$0xff]
    %v94 = vld [vmem:[#allocation8 + $0x110] sm:$0xff]
    %v95 = vld [vmem:[#allocation8 + $0x118] sm:$0xff]
    %v96 = vld [vmem:[#allocation8 + $0x120] sm:$0xff]
    %v97 = vld [vmem:[#allocation8 + $0x128] sm:$0xff]
    %v98 = vld [vmem:[#allocation8 + $0x130] sm:$0xff]
    %v99 = vld [vmem:[#allocation8 + $0x138] sm:$0xff]
    %v100 = vld [vmem:[#allocation8 + $0x140] sm:$0xff]
    %v101 = vld [vmem:[#allocation8 + $0x148] sm:$0xff]
    %v102 = vld [vmem:[#allocation8 + $0x150] sm:$0xff]
    %v103 = vld [vmem:[#allocation8 + $0x158] sm:$0xff]
    %v104 = vld [vmem:[#allocation8 + $0x160] sm:$0xff]
    %v105 = vld [vmem:[#allocation8 + $0x168] sm:$0xff]
    %v106 = vld [vmem:[#allocation8 + $0x170] sm:$0xff]
    %v107 = vld [vmem:[#allocation8 + $0x178] sm:$0xff]
    %v108 = vld [vmem:[#allocation8 + $0x180] sm:$0xff]
    %v109 = vld [vmem:[#allocation8 + $0x188] sm:$0xff]
    %v110 = vld [vmem:[#allocation8 + $0x190] sm:$0xff]
    %v111 = vld [vmem:[#allocation8 + $0x198] sm:$0xff]
    %v112 = vld [vmem:[#allocation8 + $0x1a0] sm:$0xff]
    %v113 = vld [vmem:[#allocation8 + $0x1a8] sm:$0xff]
    %v114 = vld [vmem:[#allocation8 + $0x1b0] sm:$0xff]
    %v115 = vld [vmem:[#allocation8 + $0x1b8] sm:$0xff]
    %v116 = vld [vmem:[#allocation8 + $0x1c0] sm:$0xff]
    %v117 = vld [vmem:[#allocation8 + $0x1c8] sm:$0xff]
    %v118 = vld [vmem:[#allocation8 + $0x1d0] sm:$0xff]
    %v119 = vld [vmem:[#allocation8 + $0x1d8] sm:$0xff]
    %v120 = vld [vmem:[#allocation8 + $0x1e0] sm:$0xff]
    %v121 = vld [vmem:[#allocation8 + $0x1e8] sm:$0xff]
    %v122 = vld [vmem:[#allocation8 + $0x1f0] sm:$0xff]
    %v123 = vld [vmem:[#allocation8 + $0x1f8] sm:$0xff]
    %v124 = vld [vmem:[#allocation5] sm:$0xf]
    %v125 = vlaneseq
    %v126 = vshrl.u32 %v125, 7
    %v127 = vlaneseq
    %v128 = vshrl.u32 %v127, 7
    %v129 = vsub.s32 0, %v128
    %v130 = vrot.slane %v124, %v129
    %v131 = vlaneseq
    %v132 = vshrl.u32 %v131, 7
    %v133 = vsub.s32 1, %v132
    %v134 = vrot.slane %v124, %v133
    %v135 = vlaneseq
    %v136 = vshrl.u32 %v135, 7
    %v137 = vsub.s32 2, %v136
    %v138 = vrot.slane %v124, %v137
    %v139 = vlaneseq
    %v140 = vshrl.u32 %v139, 7
    %v141 = vsub.s32 3, %v140
    %v142 = vrot.slane %v124, %v141
    %vm143 = vcmp.eq.s32.totalorder %v126, %v130
    %vm144 = vcmp.eq.s32.totalorder %v126, %v134
    %vm145 = vcmp.eq.s32.totalorder %v126, %v138
    %vm146 = vcmp.eq.s32.totalorder %v126, %v142
    %v147 = vsel %vm143, 1, 0
    %v148 = vsel %vm144, 1, 0
    %v149 = vsel %vm145, 1, 0
    %v150 = vsel %vm146, 1, 0
    %v151 = vcvt.s32.f32 %v147
    %v152 = vcvt.s32.f32 %v148
    %v153 = vcvt.s32.f32 %v149
    %v154 = vcvt.s32.f32 %v150
    %v155 = vld [vmem:[#allocation2] sm:$0xff]
    %156 = vmatprep.subr.mxu0 0.0
    %157 = vmatpush1.msra.mxu0 %v75
    %158 = vmatprep.subr.mxu0 0.0
    %159 = vmatpush1.msra.mxu0 %v74
    %160 = vmatprep.subr.mxu0 0.0
    %161 = vmatpush1.msra.mxu0 %v73
    %162 = vmatprep.subr.mxu0 0.0
    %163 = vmatpush1.msra.mxu0 %v72
    %164 = vmatprep.subr.mxu0 0.0
    %165 = vmatpush1.msra.mxu0 %v71
    %166 = vmatprep.subr.mxu0 0.0
    %167 = vmatpush1.msra.mxu0 %v70
    %168 = vmatprep.subr.mxu0 0.0
    %169 = vmatpush1.msra.mxu0 %v69
    %170 = vmatprep.subr.mxu0 0.0
    %171 = vmatpush1.msra.mxu0 %v68
    %172 = vmatprep.subr.mxu0 0.0
    %173 = vmatpush1.msra.mxu0 %v67
    %174 = vmatprep.subr.mxu0 0.0
    %175 = vmatpush1.msra.mxu0 %v66
    %176 = vmatprep.subr.mxu0 0.0
    %177 = vmatpush1.msra.mxu0 %v65
    %178 = vmatprep.subr.mxu0 0.0
    %179 = vmatpush1.msra.mxu0 %v64
    %180 = vmatprep.subr.mxu0 0.0
    %181 = vmatpush1.msra.mxu0 %v63
    %182 = vmatprep.subr.mxu0 0.0
    %183 = vmatpush1.msra.mxu0 %v62
    %184 = vmatprep.subr.mxu0 0.0
    %185 = vmatpush1.msra.mxu0 %v61
    %186 = vmatprep.subr.mxu0 0.0
    %187 = vmatpush1.msra.mxu0 %v60
    %188 = vmatprep.subr.mxu0 0.0
    %189 = vmatpush2.msra.mxu0 %v91
    %190 = vmatprep.subr.mxu0 0.0
    %191 = vmatpush2.msra.mxu0 %v90
    %192 = vmatprep.subr.mxu0 0.0
    %193 = vmatpush2.msra.mxu0 %v89
    %194 = vmatprep.subr.mxu0 0.0
    %195 = vmatpush2.msra.mxu0 %v88
    %196 = vmatprep.subr.mxu0 0.0
    %197 = vmatpush2.msra.mxu0 %v87
    %198 = vmatprep.subr.mxu0 0.0
    %199 = vmatpush2.msra.mxu0 %v86
    %200 = vmatprep.subr.mxu0 0.0
    %201 = vmatpush2.msra.mxu0 %v85
    %202 = vmatprep.subr.mxu0 0.0
    %203 = vmatpush2.msra.mxu0 %v84
    %204 = vmatprep.subr.mxu0 0.0
    %205 = vmatpush2.msra.mxu0 %v83
    %206 = vmatprep.subr.mxu0 0.0
    %207 = vmatpush2.msra.mxu0 %v82
    %208 = vmatprep.subr.mxu0 0.0
    %209 = vmatpush2.msra.mxu0 %v81
    %210 = vmatprep.subr.mxu0 0.0
    %211 = vmatpush2.msra.mxu0 %v80
    %212 = vmatprep.subr.mxu0 0.0
    %213 = vmatpush2.msra.mxu0 %v79
    %214 = vmatprep.subr.mxu0 0.0
    %215 = vmatpush2.msra.mxu0 %v78
    %216 = vmatprep.subr.mxu0 0.0
    %217 = vmatpush2.msra.mxu0 %v77
    %218 = vmatprep.subr.mxu0 0.0
    %219 = vmatpush2.msra.mxu0 %v76
    %220 = vmatprep.mubr.f32.mxu0 %v152
    %221 = vmatmul.mubr.f32.gmra.mxu0 %v151
    %v222 = vpop.f32.mrf.mxu0
    %v223 = vadd.f32 0.0, %v222
    %v224 = vpop.f32.mrf.mxu0
    %225 = vdwg.mxu0
    %226 = vmatprep.subr.mxu0 0.0
    %227 = vmatpush1.msra.mxu0 %v107
    %228 = vmatprep.subr.mxu0 0.0
    %229 = vmatpush1.msra.mxu0 %v106
    %230 = vmatprep.subr.mxu0 0.0
    %231 = vmatpush1.msra.mxu0 %v105
    %232 = vmatprep.subr.mxu0 0.0
    %233 = vmatpush1.msra.mxu0 %v104
    %234 = vmatprep.subr.mxu0 0.0
    %235 = vmatpush1.msra.mxu0 %v103
    %236 = vmatprep.subr.mxu0 0.0
    %237 = vmatpush1.msra.mxu0 %v102
    %238 = vmatprep.subr.mxu0 0.0
    %239 = vmatpush1.msra.mxu0 %v101
    %240 = vmatprep.subr.mxu0 0.0
    %241 = vmatpush1.msra.mxu0 %v100
    %242 = vmatprep.subr.mxu0 0.0
    %243 = vmatpush1.msra.mxu0 %v99
    %244 = vmatprep.subr.mxu0 0.0
    %245 = vmatpush1.msra.mxu0 %v98
    %246 = vmatprep.subr.mxu0 0.0
    %247 = vmatpush1.msra.mxu0 %v97
    %248 = vmatprep.subr.mxu0 0.0
    %249 = vmatpush1.msra.mxu0 %v96
    %250 = vmatprep.subr.mxu0 0.0
    %251 = vmatpush1.msra.mxu0 %v95
    %252 = vmatprep.subr.mxu0 0.0
    %253 = vmatpush1.msra.mxu0 %v94
    %254 = vmatprep.subr.mxu0 0.0
    %255 = vmatpush1.msra.mxu0 %v93
    %256 = vmatprep.subr.mxu0 0.0
    %257 = vmatpush1.msra.mxu0 %v92
    %258 = vmatprep.subr.mxu0 0.0
    %259 = vmatpush2.msra.mxu0 %v123
    %260 = vmatprep.subr.mxu0 0.0
    %261 = vmatpush2.msra.mxu0 %v122
    %262 = vmatprep.subr.mxu0 0.0
    %263 = vmatpush2.msra.mxu0 %v121
    %264 = vmatprep.subr.mxu0 0.0
    %265 = vmatpush2.msra.mxu0 %v120
    %266 = vmatprep.subr.mxu0 0.0
    %267 = vmatpush2.msra.mxu0 %v119
    %268 = vmatprep.subr.mxu0 0.0
    %269 = vmatpush2.msra.mxu0 %v118
    %270 = vmatprep.subr.mxu0 0.0
    %271 = vmatpush2.msra.mxu0 %v117
    %272 = vmatprep.subr.mxu0 0.0
    %273 = vmatpush2.msra.mxu0 %v116
    %274 = vmatprep.subr.mxu0 0.0
    %275 = vmatpush2.msra.mxu0 %v115
    %276 = vmatprep.subr.mxu0 0.0
    %277 = vmatpush2.msra.mxu0 %v114
    %278 = vmatprep.subr.mxu0 0.0
    %279 = vmatpush2.msra.mxu0 %v113
    %280 = vmatprep.subr.mxu0 0.0
    %281 = vmatpush2.msra.mxu0 %v112
    %282 = vmatprep.subr.mxu0 0.0
    %283 = vmatpush2.msra.mxu0 %v111
    %284 = vmatprep.subr.mxu0 0.0
    %285 = vmatpush2.msra.mxu0 %v110
    %286 = vmatprep.subr.mxu0 0.0
    %287 = vmatpush2.msra.mxu0 %v109
    %288 = vmatprep.subr.mxu0 0.0
    %289 = vmatpush2.msra.mxu0 %v108
    %290 = vmatprep.mubr.f32.mxu0 %v154
    %291 = vmatmul.mubr.f32.gmra.mxu0 %v153
    %v292 = vpop.f32.mrf.mxu0
    %v293 = vadd.f32 %v223, %v292
    %v294 = vpop.f32.mrf.mxu0
    %295 = vdwg.mxu0
    %v296 = vadd.f32 %v155, %v293
    %297 = vst [vmem:[#allocation2] sm:$0xff] %v296
    %v298 = vld [vmem:[#allocation3] sm:$0xff]
    %v299 = vmul.f32 %v60, %v60
    %v300 = vmul.f32 %v61, %v61
    %v301 = vmul.f32 %v62, %v62
    %v302 = vmul.f32 %v63, %v63
    %v303 = vmul.f32 %v64, %v64
    %v304 = vmul.f32 %v65, %v65
    %v305 = vmul.f32 %v66, %v66
    %v306 = vmul.f32 %v67, %v67
    %v307 = vmul.f32 %v68, %v68
    %v308 = vmul.f32 %v69, %v69
    %v309 = vmul.f32 %v70, %v70
    %v310 = vmul.f32 %v71, %v71
    %v311 = vmul.f32 %v72, %v72
    %v312 = vmul.f32 %v73, %v73
    %v313 = vmul.f32 %v74, %v74
    %v314 = vmul.f32 %v75, %v75
    %v315 = vmul.f32 %v76, %v76
    %v316 = vmul.f32 %v77, %v77
    %v317 = vmul.f32 %v78, %v78
    %v318 = vmul.f32 %v79, %v79
    %v319 = vmul.f32 %v80, %v80
    %v320 = vmul.f32 %v81, %v81
    %v321 = vmul.f32 %v82, %v82
    %v322 = vmul.f32 %v83, %v83
    %v323 = vmul.f32 %v84, %v84
    %v324 = vmul.f32 %v85, %v85
    %v325 = vmul.f32 %v86, %v86
    %v326 = vmul.f32 %v87, %v87
    %v327 = vmul.f32 %v88, %v88
    %v328 = vmul.f32 %v89, %v89
    %v329 = vmul.f32 %v90, %v90
    %v330 = vmul.f32 %v91, %v91
    %v331 = vmul.f32 %v92, %v92
    %v332 = vmul.f32 %v93, %v93
    %v333 = vmul.f32 %v94, %v94
    %v334 = vmul.f32 %v95, %v95
    %v335 = vmul.f32 %v96, %v96
    %v336 = vmul.f32 %v97, %v97
    %v337 = vmul.f32 %v98, %v98
    %v338 = vmul.f32 %v99, %v99
    %v339 = vmul.f32 %v100, %v100
    %v340 = vmul.f32 %v101, %v101
    %v341 = vmul.f32 %v102, %v102
    %v342 = vmul.f32 %v103, %v103
    %v343 = vmul.f32 %v104, %v104
    %v344 = vmul.f32 %v105, %v105
    %v345 = vmul.f32 %v106, %v106
    %v346 = vmul.f32 %v107, %v107
    %v347 = vmul.f32 %v108, %v108
    %v348 = vmul.f32 %v109, %v109
    %v349 = vmul.f32 %v110, %v110
    %v350 = vmul.f32 %v111, %v111
    %v351 = vmul.f32 %v112, %v112
    %v352 = vmul.f32 %v113, %v113
    %v353 = vmul.f32 %v114, %v114
    %v354 = vmul.f32 %v115, %v115
    %v355 = vmul.f32 %v116, %v116
    %v356 = vmul.f32 %v117, %v117
    %v357 = vmul.f32 %v118, %v118
    %v358 = vmul.f32 %v119, %v119
    %v359 = vmul.f32 %v120, %v120
    %v360 = vmul.f32 %v121, %v121
    %v361 = vmul.f32 %v122, %v122
    %v362 = vmul.f32 %v123, %v123
    %363 = vmatprep.subr.mxu0 0.0
    %364 = vmatpush1.msra.mxu0 %v314
    %365 = vmatprep.subr.mxu0 0.0
    %366 = vmatpush1.msra.mxu0 %v313
    %367 = vmatprep.subr.mxu0 0.0
    %368 = vmatpush1.msra.mxu0 %v312
    %369 = vmatprep.subr.mxu0 0.0
    %370 = vmatpush1.msra.mxu0 %v311
    %371 = vmatprep.subr.mxu0 0.0
    %372 = vmatpush1.msra.mxu0 %v310
    %373 = vmatprep.subr.mxu0 0.0
    %374 = vmatpush1.msra.mxu0 %v309
    %375 = vmatprep.subr.mxu0 0.0
    %376 = vmatpush1.msra.mxu0 %v308
    %377 = vmatprep.subr.mxu0 0.0
    %378 = vmatpush1.msra.mxu0 %v307
    %379 = vmatprep.subr.mxu0 0.0
    %380 = vmatpush1.msra.mxu0 %v306
    %381 = vmatprep.subr.mxu0 0.0
    %382 = vmatpush1.msra.mxu0 %v305
    %383 = vmatprep.subr.mxu0 0.0
    %384 = vmatpush1.msra.mxu0 %v304
    %385 = vmatprep.subr.mxu0 0.0
    %386 = vmatpush1.msra.mxu0 %v303
    %387 = vmatprep.subr.mxu0 0.0
    %388 = vmatpush1.msra.mxu0 %v302
    %389 = vmatprep.subr.mxu0 0.0
    %390 = vmatpush1.msra.mxu0 %v301
    %391 = vmatprep.subr.mxu0 0.0
    %392 = vmatpush1.msra.mxu0 %v300
    %393 = vmatprep.subr.mxu0 0.0
    %394 = vmatpush1.msra.mxu0 %v299
    %395 = vmatprep.subr.mxu0 0.0
    %396 = vmatpush2.msra.mxu0 %v330
    %397 = vmatprep.subr.mxu0 0.0
    %398 = vmatpush2.msra.mxu0 %v329
    %399 = vmatprep.subr.mxu0 0.0
    %400 = vmatpush2.msra.mxu0 %v328
    %401 = vmatprep.subr.mxu0 0.0
    %402 = vmatpush2.msra.mxu0 %v327
    %403 = vmatprep.subr.mxu0 0.0
    %404 = vmatpush2.msra.mxu0 %v326
    %405 = vmatprep.subr.mxu0 0.0
    %406 = vmatpush2.msra.mxu0 %v325
    %407 = vmatprep.subr.mxu0 0.0
    %408 = vmatpush2.msra.mxu0 %v324
    %409 = vmatprep.subr.mxu0 0.0
    %410 = vmatpush2.msra.mxu0 %v323
    %411 = vmatprep.subr.mxu0 0.0
    %412 = vmatpush2.msra.mxu0 %v322
    %413 = vmatprep.subr.mxu0 0.0
    %414 = vmatpush2.msra.mxu0 %v321
    %415 = vmatprep.subr.mxu0 0.0
    %416 = vmatpush2.msra.mxu0 %v320
    %417 = vmatprep.subr.mxu0 0.0
    %418 = vmatpush2.msra.mxu0 %v319
    %419 = vmatprep.subr.mxu0 0.0
    %420 = vmatpush2.msra.mxu0 %v318
    %421 = vmatprep.subr.mxu0 0.0
    %422 = vmatpush2.msra.mxu0 %v317
    %423 = vmatprep.subr.mxu0 0.0
    %424 = vmatpush2.msra.mxu0 %v316
    %425 = vmatprep.subr.mxu0 0.0
    %426 = vmatpush2.msra.mxu0 %v315
    %427 = vmatprep.mubr.f32.mxu0 %v152
    %428 = vmatmul.mubr.f32.gmra.mxu0 %v151
    %v429 = vpop.f32.mrf.mxu0
    %v430 = vadd.f32 0.0, %v429
    %v431 = vpop.f32.mrf.mxu0
    %432 = vdwg.mxu0
    %433 = vmatprep.subr.mxu0 0.0
    %434 = vmatpush1.msra.mxu0 %v346
    %435 = vmatprep.subr.mxu0 0.0
    %436 = vmatpush1.msra.mxu0 %v345
    %437 = vmatprep.subr.mxu0 0.0
    %438 = vmatpush1.msra.mxu0 %v344
    %439 = vmatprep.subr.mxu0 0.0
    %440 = vmatpush1.msra.mxu0 %v343
    %441 = vmatprep.subr.mxu0 0.0
    %442 = vmatpush1.msra.mxu0 %v342
    %443 = vmatprep.subr.mxu0 0.0
    %444 = vmatpush1.msra.mxu0 %v341
    %445 = vmatprep.subr.mxu0 0.0
    %446 = vmatpush1.msra.mxu0 %v340
    %447 = vmatprep.subr.mxu0 0.0
    %448 = vmatpush1.msra.mxu0 %v339
    %449 = vmatprep.subr.mxu0 0.0
    %450 = vmatpush1.msra.mxu0 %v338
    %451 = vmatprep.subr.mxu0 0.0
    %452 = vmatpush1.msra.mxu0 %v337
    %453 = vmatprep.subr.mxu0 0.0
    %454 = vmatpush1.msra.mxu0 %v336
    %455 = vmatprep.subr.mxu0 0.0
    %456 = vmatpush1.msra.mxu0 %v335
    %457 = vmatprep.subr.mxu0 0.0
    %458 = vmatpush1.msra.mxu0 %v334
    %459 = vmatprep.subr.mxu0 0.0
    %460 = vmatpush1.msra.mxu0 %v333
    %461 = vmatprep.subr.mxu0 0.0
    %462 = vmatpush1.msra.mxu0 %v332
    %463 = vmatprep.subr.mxu0 0.0
    %464 = vmatpush1.msra.mxu0 %v331
    %465 = vmatprep.subr.mxu0 0.0
    %466 = vmatpush2.msra.mxu0 %v362
    %467 = vmatprep.subr.mxu0 0.0
    %468 = vmatpush2.msra.mxu0 %v361
    %469 = vmatprep.subr.mxu0 0.0
    %470 = vmatpush2.msra.mxu0 %v360
    %471 = vmatprep.subr.mxu0 0.0
    %472 = vmatpush2.msra.mxu0 %v359
    %473 = vmatprep.subr.mxu0 0.0
    %474 = vmatpush2.msra.mxu0 %v358
    %475 = vmatprep.subr.mxu0 0.0
    %476 = vmatpush2.msra.mxu0 %v357
    %477 = vmatprep.subr.mxu0 0.0
    %478 = vmatpush2.msra.mxu0 %v356
    %479 = vmatprep.subr.mxu0 0.0
    %480 = vmatpush2.msra.mxu0 %v355
    %481 = vmatprep.subr.mxu0 0.0
    %482 = vmatpush2.msra.mxu0 %v354
    %483 = vmatprep.subr.mxu0 0.0
    %484 = vmatpush2.msra.mxu0 %v353
    %485 = vmatprep.subr.mxu0 0.0
    %486 = vmatpush2.msra.mxu0 %v352
    %487 = vmatprep.subr.mxu0 0.0
    %488 = vmatpush2.msra.mxu0 %v351
    %489 = vmatprep.subr.mxu0 0.0
    %490 = vmatpush2.msra.mxu0 %v350
    %491 = vmatprep.subr.mxu0 0.0
    %492 = vmatpush2.msra.mxu0 %v349
    %493 = vmatprep.subr.mxu0 0.0
    %494 = vmatpush2.msra.mxu0 %v348
    %495 = vmatprep.subr.mxu0 0.0
    %496 = vmatpush2.msra.mxu0 %v347
    %497 = vmatprep.mubr.f32.mxu0 %v154
    %498 = vmatmul.mubr.f32.gmra.mxu0 %v153
    %v499 = vpop.f32.mrf.mxu0
    %v500 = vadd.f32 %v430, %v499
    %v501 = vpop.f32.mrf.mxu0
    %502 = vdwg.mxu0
    %v503 = vadd.f32 %v298, %v500
    %504 = vst [vmem:[#allocation3] sm:$0xff] %v503
    %v505 = vld [vmem:[#allocation4] sm:$0xff]
    %v506 = vadd.f32 %v151, %v152
    %v507 = vadd.f32 %v506, %v153
    %v508 = vadd.f32 %v507, %v154
    %509 = vadd.xlane.f32.xlu0 %v508
    %v510 = vpop.xlane.xlu0 %509
    %v511 = vadd.f32 %v505, %v510
    %vm512 = vcmask 7168
    %513 = vst.msk [vmem:[#allocation4] sm:$0xff] %vm512, %v511
    // Predicated region
    $region30: #{tpu_custom_call.1} parent=1 // pred_check
      %p514 = pneg %p52
    $region31: #{tpu_custom_call.1} parent=1 // pred_check_branch
      %516 = sbr.rel (%p514) target = $region33
    $region32: #{tpu_custom_call.1} parent=1 // pred_region
      %v517 = vld [vmem:[#allocation2] sm:$0xff]
      %v518 = vld [vmem:[#allocation4] sm:$0xff]
      %v519 = vld [vmem:[#allocation3] sm:$0xff]
      %520 = vadd.xlane.f32.xlu0 %v519
      %v521 = vpop.xlane.xlu0 %520
      %v522 = vld [vmem:[#allocation10] sm:$0xff]
      %vm523 = vcmp.gt.f32.partialorder %v518, 0.0
      %vm524 = vcmp.ge.s32.totalorder %v126, 1
      %vm525 = vmand %vm523, %vm524
      %v526 = vsel %vm525, %v518, 1.0
      %v527 = vmul.f32 %v517, %v522
      %528 = vadd.xlane.f32.xlu0 %v527
      %v529 = vpop.xlane.xlu0 %528
      %v530 = vmul.f32 %v522, %v522
      %531 = vadd.xlane.f32.xlu0 %v530
      %v532 = vpop.xlane.xlu0 %531
      %v533 = vmul.f32 %v529, 2.0
      %v534 = vsub.f32 %v521, %v533
      %v535 = vmul.f32 %v518, %v532
      %v536 = vadd.f32 %v534, %v535
      %v537 = vrcp.pop %v526
      %v538 = vmul.f32 %v536, %v537
      %v539 = vmul.f32 %v538, 0.03125
      %v540 = vsel %vm525, %v539, 0.0
      %v541 = vsel %vm512, %v540, 0.0
      %542 = vadd.xlane.f32.xlu0 %v541
      %v543 = vpop.xlane.xlu0 %542
      %v544 = vrot.slane %v543, 4
      %v545 = vadd.f32 %v543, %v544
      %v546 = vrot.slane %v545, 2
      %v547 = vadd.f32 %v545, %v546
      %v548 = vrot.slane %v547, 1
      %v549 = vadd.f32 %v547, %v548
      %s550 = vtos %v549
      %s551 = scalar_lea.smem [#allocation11], 0
      %552 = sst [smem:[%s551]] %s550
    $region33: #{tpu_custom_call.1} parent=1 // pred_fallthru
      _
    // Predicated region
    $region34: #{tpu_custom_call.1} parent=1 // pred_check
      _
    $region35: #{tpu_custom_call.1} parent=1 // pred_check_branch
      %554 = sbr.rel (0) target = $region37
    $region36: #{tpu_custom_call.1} parent=1 // pred_region
      %s556 = ssub.s32 16, 16
      %557 = vsyncadd [#allocation7], %s556
      %560 = dma.smem_to_hbm [#allocation11], 16, %s3, [#allocation7]
    $region37: #{tpu_custom_call.1} parent=1 // pred_fallthru
      _
    // Predicated region
    $region38: #{tpu_custom_call.1} parent=1 // pred_check
      _
    $region39: #{tpu_custom_call.1} parent=1 // pred_check_branch
      %562 = sbr.rel (0) target = $region41
    $region40: #{tpu_custom_call.1} parent=1 // pred_region
      %563 = dma.done [#allocation7], 16
    $region41: #{tpu_custom_call.1} parent=1 // pred_fallthru
      _
    %564 = sfence
    %565 = vsyncpa [#allocation6], 1
    %566 = vsyncpa [#allocation9], 1
    %567 = vsyncpa [#allocation7], 1

</llo_original>
